<compile_context>
chip_gen: v5e
topology: v5e:2x2
jax: 0.10.0
libtpu: 0.0.40
codegen_flags: <defaults>
</compile_context>

<pallas_src>
import functools

import numpy as np
import jax
import jax.numpy as jnp
from jax import lax
from jax.experimental import pallas as pl
from jax.experimental.pallas import tpu as pltpu

_MXU_DTYPE = jnp.bfloat16   # MXU inputs for the 3x3 convs (accumulation stays f32)
_BN_EPS = 1e-5              # torch.nn.BatchNorm2d default


def _round_up(x, m):
    return ((x + m - 1) // m) * m


# ---------------------------------------------------------------------------
# pltpu.roll convention probe (must run eagerly, before tracing the forward)
# ---------------------------------------------------------------------------
_ROLL_MATCHES_NUMPY = None


def _probe_roll_semantics():
    """Resolve whether pltpu.roll follows np.roll (out[i] = in[i - shift])."""
    global _ROLL_MATCHES_NUMPY
    if _ROLL_MATCHES_NUMPY is None:
        def probe_kernel(x_ref, o_ref):
            o_ref[...] = pltpu.roll(x_ref[...], 1, axis=1)

        x = jnp.asarray(np.broadcast_to(np.arange(128, dtype=np.float32), (8, 128)))
        y = np.asarray(pl.pallas_call(
            probe_kernel,
            out_shape=jax.ShapeDtypeStruct((8, 128), jnp.float32))(x))
        if y[0, 0] == 127.0:
            _ROLL_MATCHES_NUMPY = True
        elif y[0, 0] == 1.0:
            _ROLL_MATCHES_NUMPY = False
        else:
            raise RuntimeError("pltpu.roll probe returned unexpected values")
    return _ROLL_MATCHES_NUMPY


# ---------------------------------------------------------------------------
# Trace-time constant builders
# ---------------------------------------------------------------------------
def _conv_tap_masks(n, h, w, m_pad):
    """(9, m_pad) f32: 1 where tap (ky, kx)'s source pixel is valid for that lane."""
    m_true = n * h * w
    idx = np.arange(m_true)
    i = (idx // w) % h
    j = idx % w
    masks = np.zeros((9, m_pad), np.float32)
    for ky in range(3):
        for kx in range(3):
            dy, dx = ky - 1, kx - 1
            ok = (i + dy >= 0) & (i + dy < h) & (j + dx >= 0) & (j + dx < w)
            masks[ky * 3 + kx, :m_true] = ok.astype(np.float32)
    return masks


def _interp_matrix_1d(src, dst):
    """1-D bilinear interpolation matrix (dst, src), align_corners=True."""
    a = np.zeros((dst, src), np.float32)
    for o in range(dst):
        s = 0.0 if dst == 1 else o * (src - 1) / (dst - 1)
        i0 = min(int(np.floor(s)), src - 1)
        i1 = min(i0 + 1, src - 1)
        f = s - i0
        a[o, i0] += 1.0 - f
        a[o, i1] += f
    return a


def _upsample_matrix(n, h, w, m_pad, out_h, out_w):
    """(m_pad, n*out_h*out_w): y_flat @ U == bilinear align_corners=True upsample."""
    # TODO(synk): at realistic inshape switch to separable row/col interpolation (two
    # small matmuls on the un-flattened (h, w) axes); this dense Kron matrix scales
    # quadratically and would exhaust v7x's 64 MiB VMEM first.
    a = np.kron(_interp_matrix_1d(h, out_h), _interp_matrix_1d(w, out_w))  # (HW, hw)
    hw, big = h * w, out_h * out_w
    u = np.zeros((m_pad, n * big), np.float32)
    for b in range(n):
        u[b * hw:(b + 1) * hw, b * big:(b + 1) * big] = a.T
    return u


def _downsample_select(n, h, w, m_pad_in, ho, wo, m_pad_out):
    """(m_pad_in, m_pad_out) 0/1 matrix picking the stride-2 output positions."""
    # TODO(synk): replace with strided tap construction at realistic sizes (this dense
    # matrix is O(M_in * M_out)).
    s = np.zeros((m_pad_in, m_pad_out), np.float32)
    for b in range(n):
        for io in range(ho):
            for jo in range(wo):
                src = b * h * w + (2 * io) * w + (2 * jo)
                dst = b * ho * wo + io * wo + jo
                s[src, dst] = 1.0
    return s


def _w_taps(w):
    """(Cout, Cin, 3, 3) -> (Cout, 9*Cin) bf16, column index = (ky*3+kx)*Cin + cin."""
    cout, cin = w.shape[0], w.shape[1]
    return jnp.transpose(w, (0, 2, 3, 1)).reshape(cout, 9 * cin).astype(_MXU_DTYPE)


# ---------------------------------------------------------------------------
# Fused whole-network Pallas kernel
# ---------------------------------------------------------------------------
def _multilevel_kernel(*refs, num_levels, c, f, img_ws, m_trues, m_pads,
                       identity_up, inv_levels, roll_np):
    """Whole MultiLevelNet forward.  refs = (*inputs, out_ref, stack_scratch)."""
    out_ref, scr_ref = refs[-2], refs[-1]
    it = iter(refs[:-2])
    x0_ref = next(it)

    lvl, down = [], []
    for i in range(num_levels):
        p = {"bn1_g": next(it), "bn1_b": next(it), "w1": next(it), "b1": next(it),
             "bn2_g": next(it), "bn2_b": next(it), "w2": next(it), "b2": next(it),
             "maskC": next(it), "maskF": next(it)}
        p["u"] = None if identity_up[i] else next(it)
        lvl.append(p)
        if i + 1 < num_levels:
            down.append({"wd": next(it), "bd": next(it), "s": next(it)})
    rest = list(it)
    assert not rest, f"unconsumed kernel operands: {len(rest)}"

    def tap_stack(inp, cin, mp, img_w, mask_ref):
        """Masked (9*cin, mp) f32 tap-stacked operand, packed via the VMEM scratch."""
        for ky in range(3):
            for kx in range(3):
                k = ky * 3 + kx
                s = (ky - 1) * img_w + (kx - 1)            # flat source offset
                if s == 0:
                    xs = inp
                else:
                    # want xs[p] = inp[p + s]; np.roll semantics => shift = -s
                    shift = ((-s) % mp) if roll_np else (s % mp)
                    xs = pltpu.roll(inp, shift, axis=1)
                scr_ref[k * cin:(k + 1) * cin, :mp] = xs
        return scr_ref[0:9 * cin, 0:mp] * mask_ref[...]

    def conv3x3(inp, cin, mp, img_w, mask_ref, w_ref, b_ref):
        """3x3 / pad=1 / stride=1 conv as ONE K=9*cin MXU matmul (bf16 in, f32 acc)."""
        stk = tap_stack(inp, cin, mp, img_w, mask_ref).astype(_MXU_DTYPE)
        return jnp.dot(w_ref[...], stk,
                       preferred_element_type=jnp.float32) + b_ref[...]

    def batchnorm(inp, g_ref, b_ref, lane_valid, inv_cnt):
        """Training-mode BatchNorm2d (per-batch stats, biased variance), f32."""
        mean = jnp.sum(inp, axis=1, keepdims=True) * inv_cnt
        cen = (inp - mean) * lane_valid
        var = jnp.sum(cen * cen, axis=1, keepdims=True) * inv_cnt
        return cen * lax.rsqrt(var + _BN_EPS) * g_ref[...] + b_ref[...]

    cur = x0_ref[...]                                       # (C, Mp0) f32
    acc = jnp.zeros(out_ref.shape, jnp.float32)
    for i in range(num_levels):
        p = lvl[i]
        mp, img_w = m_pads[i], img_ws[i]
        inv_cnt = 1.0 / float(m_trues[i])
        lane_valid = p["maskC"][4 * c:4 * c + 1, :]         # center tap == lane < m_true

        # ---- BN -> conv3x3 + tanh -> BN -> conv3x3 --------------------------
        xn = batchnorm(cur, p["bn1_g"], p["bn1_b"], lane_valid, inv_cnt)
        h1 = jnp.tanh(conv3x3(xn, c, mp, img_w, p["maskC"], p["w1"], p["b1"]))
        h1 = h1 * lane_valid
        h2 = batchnorm(h1, p["bn2_g"], p["bn2_b"], lane_valid, inv_cnt)
        y2 = conv3x3(h2, f, mp, img_w, p["maskF"], p["w2"], p["b2"]) * lane_valid

        # ---- bilinear (align_corners) upsample to inshape, accumulate 1/L ---
        up = y2 if p["u"] is None else jnp.dot(y2, p["u"][...],
                                               preferred_element_type=jnp.float32)
        acc = acc + up * inv_levels

        # ---- stride-2 downsample conv -> next pyramid level input -----------
        # Selection is applied to the tap operand so the conv matmul's N dimension
        # is already the next level's (smaller) lane count.
        if i + 1 < num_levels:
            d = down[i]
            stk = tap_stack(cur, c, mp, img_w, p["maskC"])               # (9C, Mp)
            sel = jnp.dot(stk, d["s"][...],
                          preferred_element_type=jnp.float32)            # (9C, Mp_next)
            nxt = jnp.dot(d["wd"][...], sel.astype(_MXU_DTYPE),
                          preferred_element_type=jnp.float32) + d["bd"][...]
            lane_valid_next = lvl[i + 1]["maskC"][4 * c:4 * c + 1, :]
            cur = nxt * lane_valid_next

    out_ref[...] = acc


# ---------------------------------------------------------------------------
# MultiLevelNet parameters + forward
# ---------------------------------------------------------------------------
def init_params(key, in_channels=2, levels=3, features=16):
    params = {"down": [], "blocks": []}
    for _ in range(levels):
        key, k1, k2 = jax.random.split(key, 3)
        params["down"].append({
            "w": 0.1 * jax.random.normal(k1, (in_channels, in_channels, 3, 3), jnp.float32),
            "b": 0.01 * jax.random.normal(k2, (in_channels,), jnp.float32),
        })
    for _ in range(levels + 1):
        key, k1, k2, k3, k4 = jax.random.split(key, 5)
        params["blocks"].append({
            "bn1_g": jnp.ones((in_channels,), jnp.float32),
            "bn1_b": jnp.zeros((in_channels,), jnp.float32),
            "w1": 0.1 * jax.random.normal(k1, (features, in_channels, 3, 3), jnp.float32),
            "b1": 0.01 * jax.random.normal(k2, (features,), jnp.float32),
            "bn2_g": jnp.ones((features,), jnp.float32),
            "bn2_b": jnp.zeros((features,), jnp.float32),
            "w2": 0.1 * jax.random.normal(k3, (in_channels, features, 3, 3), jnp.float32),
            "b2": 0.01 * jax.random.normal(k4, (in_channels,), jnp.float32),
        })
    return params


def multilevelnet_forward(x, params, inshape=(16, 16), levels=3):
    """Mirrors MultiLevelNet.forward (SpatialTransformer is unused in that forward)."""
    if _ROLL_MATCHES_NUMPY is None:
        raise RuntimeError("call _probe_roll_semantics() once (outside jit) before "
                           "tracing multilevelnet_forward")

    n, c, h0, w0 = x.shape
    out_h, out_w = inshape
    f = params["blocks"][0]["w1"].shape[0]
    num_levels = levels + 1
    inv_levels = 1.0 / num_levels
    m_out = n * out_h * out_w

    # static pyramid geometry (conv k=3, pad=1, stride=2)
    hs, ws = [h0], [w0]
    for _ in range(levels):
        hs.append((hs[-1] - 1) // 2 + 1)
        ws.append((ws[-1] - 1) // 2 + 1)
    m_true = [n * hs[i] * ws[i] for i in range(num_levels)]
    m_pad = [max(_round_up(m, 128), 128) for m in m_true]   # lane-align

    identity_up = tuple((hs[i], ws[i]) == (out_h, out_w) and m_pad[i] == m_out
                        for i in range(num_levels))
    base_masks = [_conv_tap_masks(n, hs[i], ws[i], m_pad[i]) for i in range(num_levels)]

    # channel-major, lane-flattened (and lane-padded) input
    cur = jnp.transpose(x, (1, 0, 2, 3)).reshape(c, n * h0 * w0).astype(jnp.float32)
    if m_pad[0] > m_true[0]:
        cur = jnp.pad(cur, ((0, 0), (0, m_pad[0] - m_true[0])))

    inputs = [cur]
    for i in range(num_levels):
        blk = params["blocks"][i]
        inputs += [
            blk["bn1_g"].reshape(c, 1), blk["bn1_b"].reshape(c, 1),
            _w_taps(blk["w1"]), blk["b1"].reshape(f, 1),
            blk["bn2_g"].reshape(f, 1), blk["bn2_b"].reshape(f, 1),
            _w_taps(blk["w2"]), blk["b2"].reshape(c, 1),
            jnp.asarray(np.repeat(base_masks[i], c, axis=0)),   # (9C, Mp) stacked mask
            jnp.asarray(np.repeat(base_masks[i], f, axis=0)),   # (9F, Mp) stacked mask
        ]
        if not identity_up[i]:
            inputs.append(jnp.asarray(
                _upsample_matrix(n, hs[i], ws[i], m_pad[i], out_h, out_w)))
        if i < levels:
            dwn = params["down"][i]
            inputs += [
                _w_taps(dwn["w"]), dwn["b"].reshape(c, 1),
                jnp.asarray(_downsample_select(n, hs[i], ws[i], m_pad[i],
                                               hs[i + 1], ws[i + 1], m_pad[i + 1])),
            ]

    kernel = functools.partial(
        _multilevel_kernel, num_levels=num_levels, c=c, f=f,
        img_ws=tuple(ws), m_trues=tuple(m_true), m_pads=tuple(m_pad),
        identity_up=identity_up, inv_levels=inv_levels,
        roll_np=_ROLL_MATCHES_NUMPY)

    acc = pl.pallas_call(
        kernel,
        out_shape=jax.ShapeDtypeStruct((c, m_out), jnp.float32),
        scratch_shapes=[pltpu.VMEM((9 * max(c, f), max(m_pad)), jnp.float32)],
    )(*inputs)

    # TODO(synk): when inshape grows, tile the lane (N*h*w) axis with a grid
    # ("parallel" spatial axis + vmem_limit_bytes sized per chip generation) and on
    # v7x shard across the 2 TensorCores; at 16x16 everything fits in VMEM at once.
    return jnp.transpose(acc.reshape(c, n, out_h, out_w), (1, 0, 2, 3))


# ---------------------------------------------------------------------------
# Pure-JAX reference (f32, train-mode BN) for the correctness check
# ---------------------------------------------------------------------------
def _reference_forward(x, params, inshape=(16, 16), levels=3):
    hi = lax.Precision.HIGHEST

    def conv2d(inp, w, b, stride):
        out = lax.conv_general_dilated(
            inp, w, window_strides=(stride, stride), padding=((1, 1), (1, 1)),
            dimension_numbers=("NCHW", "OIHW", "NCHW"), precision=hi)
        return out + b[None, :, None, None]

    def batchnorm(inp, g, b):
        mean = jnp.mean(inp, axis=(0, 2, 3), keepdims=True)
        var = jnp.mean((inp - mean) ** 2, axis=(0, 2, 3), keepdims=True)
        return ((inp - mean) * lax.rsqrt(var + _BN_EPS) * g[None, :, None, None]
                + b[None, :, None, None])

    def upsample(inp, out_h, out_w):
        h, w = inp.shape[2], inp.shape[3]
        if (h, w) == (out_h, out_w):
            return inp
        r = jnp.asarray(_interp_matrix_1d(h, out_h))
        s = jnp.asarray(_interp_matrix_1d(w, out_w))
        return jnp.einsum("Ii,Jj,ncij->ncIJ", r, s, inp, precision=hi)

    x_levels = [x]
    for i in range(levels):
        x_levels.append(conv2d(x_levels[-1], params["down"][i]["w"],
                               params["down"][i]["b"], 2))
    outs = []
    for i, xl in enumerate(x_levels):
        blk = params["blocks"][i]
        t = batchnorm(xl, blk["bn1_g"], blk["bn1_b"])
        t = jnp.tanh(conv2d(t, blk["w1"], blk["b1"], 1))
        t = batchnorm(t, blk["bn2_g"], blk["bn2_b"])
        t = conv2d(t, blk["w2"], blk["b2"], 1)
        outs.append(upsample(t, inshape[0], inshape[1]))
    return sum(outs) / len(outs)


if __name__ == "__main__":
    key = jax.random.PRNGKey(0)
    kp, kx = jax.random.split(key)

    inshape = (16, 16)
    levels = 3
    params = init_params(kp, in_channels=2, levels=levels, features=16)
    x = jax.random.normal(kx, (2, 2, 16, 16), jnp.float32)   # NCHW, in_channels=2

    _probe_roll_semantics()   # resolve pltpu.roll convention before tracing (hard req.)

    fwd = jax.jit(functools.partial(multilevelnet_forward,
                                    inshape=inshape, levels=levels))
    out = jax.block_until_ready(fwd(x, params))
    assert out.shape == (2, 2, 16, 16), out.shape
    assert bool(jnp.all(jnp.isfinite(out)))

    # explicit tolerance test vs a pure-f32 JAX reference (bf16 is only used for the
    # conv-tap matmul operands, so differences stay well below this tolerance)
    ref = jax.block_until_ready(_reference_forward(x, params, inshape, levels))
    np.testing.assert_allclose(np.asarray(out), np.asarray(ref), rtol=5e-2, atol=5e-2)

    print("KERNEL_OK")
</pallas_src>

<mosaic_0001>
module attributes {stable_mosaic.version = 11 : i64} {
  func.func @probe_kernel(%arg0: memref<8x128xf32, #tpu.memory_space<vmem>>, %arg1: memref<8x128xf32, #tpu.memory_space<vmem>>) attributes {dimension_semantics = [], scalar_prefetch = 0 : i64, scratch_operands = 0 : i64, tpu.core_type = #tpu.core_type<tc>} {
    %c0 = arith.constant 0 : index
    %c0_0 = arith.constant 0 : index
    %0 = vector.load %arg0[%c0, %c0_0] : memref<8x128xf32, #tpu.memory_space<vmem>>, vector<8x128xf32>
    %c1_i32 = arith.constant 1 : i32
    %1 = tpu.dynamic_rotate %0 by %c1_i32 dim 1 : vector<8x128xf32>, i32 -> vector<8x128xf32>
    %c0_1 = arith.constant 0 : index
    %c0_2 = arith.constant 0 : index
    %2 = vector.load %arg1[%c0_1, %c0_2] : memref<8x128xf32, #tpu.memory_space<vmem>>, vector<8x128xf32>
    tpu.vector_store %arg1[%c0_1, %c0_2], %1 {strides = array<i32>} : memref<8x128xf32, #tpu.memory_space<vmem>>, vector<8x128xf32>,
    return
  }
}

</mosaic_0001>

<llo_original>
// kernel: tpu_custom_call.1
$region0: #{tpu_custom_call.1}
  #allocation0 [shape = 'u32[]', space=smem, size = 0x4, offset = 0x4, fixed_abs, tag = 'smem constant byte address 0x4 - core index']
  #allocation1 [shape = 'u32[72,128]{1,0:T(1,128)}', space=vmem, size = 0x9000, scoped, tag = 'internal scratch']
  %s0 = inlined_call_operand.hbm [shape: f32[8,128], index: 0, kind: input, shape index: {}]
  %s1 = inlined_call_operand.hbm [shape: f32[8,128], index: 1, kind: output, shape index: {}]
  %s2 = sld [smem:[#allocation0]]
  $region18: #{tpu_custom_call.1} parent=0
    _
  %s4 = ssub.s32 1, %s2
  %s5 = scalar_select 0, %s4, %s2
  $region1: #{tpu_custom_call.1} parent=0
    #allocation2 [shape = 'u8[4096]{0}', space=vmem, size = 0x1000, scoped, tag = 'input window, operand 0, single buffered']
    #allocation3 [shape = 's32[1]{0}', space=sflag, size = 0x4, scoped, tag = 'scoped memory for tpu_custom_call.1']
    #allocation4 [shape = 's32[1]{0}', space=sflag, size = 0x4, scoped, tag = 'scoped memory for tpu_custom_call.1']
    #allocation5 [shape = 'u8[4096]{0}', space=vmem, size = 0x1000, scoped, tag = 'output window, operand 0, single buffered']
    %6 = vsyncpa [#allocation3], 0
    %7 = vsyncpa [#allocation4], 0
    // Predicated region
    $region2: #{tpu_custom_call.1} parent=1 // pred_check
      _
    $region3: #{tpu_custom_call.1} parent=1 // pred_check_branch
      %9 = sbr.rel (0) target = $region5
    $region4: #{tpu_custom_call.1} parent=1 // pred_region
      %11 = vsyncadd [#allocation3], 0
      %s13 = sshll.u32 %s0, 4
      %s14 = int_to_ptr.hbm [resolvable:$true] %s13
      %s15 = sshll.u32 [#allocation2], 4
      %s16 = int_to_ptr.vmem [resolvable:$true] %s15
      %18 = dma.hbm_to_vmem [thread:$0]  %s14, 128, %s16, [#allocation3]
    $region5: #{tpu_custom_call.1} parent=1 // pred_fallthru
      _
    // Predicated region
    $region6: #{tpu_custom_call.1} parent=1 // pred_check
      _
    $region7: #{tpu_custom_call.1} parent=1 // pred_check_branch
      %20 = sbr.rel (0) target = $region9
    $region8: #{tpu_custom_call.1} parent=1 // pred_region
      %22 = dma.done [#allocation3], 128
    $region9: #{tpu_custom_call.1} parent=1 // pred_fallthru
      _
    %v23 = vld [vmem:[#allocation2] sm:$0xff]
    %24 = vrot.lane.b32.xlu0 %v23, 1
    %v25 = vpop.permute.xlu0 %24
    %26 = vst [vmem:[#allocation5] sm:$0xff] %v25
    // Predicated region
    $region10: #{tpu_custom_call.1} parent=1 // pred_check
      _
    $region11: #{tpu_custom_call.1} parent=1 // pred_check_branch
      %28 = sbr.rel (0) target = $region13
    $region12: #{tpu_custom_call.1} parent=1 // pred_region
      %30 = vsyncadd [#allocation4], 0
      %s32 = sshll.u32 [#allocation5], 4
      %s33 = int_to_ptr.vmem [resolvable:$true] %s32
      %s34 = sshll.u32 %s1, 4
      %s35 = int_to_ptr.hbm [resolvable:$true] %s34
      %37 = dma.vmem_to_hbm [thread:$0]  %s33, 128, %s35, [#allocation4]
    $region13: #{tpu_custom_call.1} parent=1 // pred_fallthru
      _
    // Predicated region
    $region14: #{tpu_custom_call.1} parent=1 // pred_check
      _
    $region15: #{tpu_custom_call.1} parent=1 // pred_check_branch
      %39 = sbr.rel (0) target = $region17
    $region16: #{tpu_custom_call.1} parent=1 // pred_region
      %41 = dma.done [#allocation4], 128
    $region17: #{tpu_custom_call.1} parent=1 // pred_fallthru
      _
    %42 = vsyncpa [#allocation3], 1
    %43 = vsyncpa [#allocation4], 1

</llo_original>
